<compile_context>
chip_gen: v5e
topology: v5e:2x2
jax: 0.10.0
libtpu: 0.0.40
codegen_flags: <defaults>
</compile_context>

<pallas_src>
import jax
import jax.numpy as jnp
from jax.experimental import pallas as pl
from jax.experimental.pallas import tpu as pltpu


_LANE_CANDIDATES = (4096, 2048, 1024, 512, 256, 128)
_TARGET_TILE_BYTES = 2 << 20  # ~2 MiB per (br, L) tile


def _round_up(x, m):
    return ((x + m - 1) // m) * m


def _choose_layout(plane_shape, dtype):
    """Pick a lane-dense 2-D view (R, L) of one plane and a row-block size."""
    total = 1
    for d in plane_shape:
        total *= int(d)
    L = None
    for cand in _LANE_CANDIDATES:
        if total % cand == 0:
            L = cand
            break
    if L is None:
        # Fallback: keep trailing dim as the (full-extent) lane axis.
        L = int(plane_shape[-1]) if len(plane_shape) >= 1 and plane_shape[-1] else 1
    R = total // L
    itemsize = jnp.dtype(dtype).itemsize
    if R <= 8:
        br = R  # single full-extent block (tiny input)
    else:
        target = max(8, (_TARGET_TILE_BYTES // (L * itemsize)) // 8 * 8)
        # Cap at ~half the rows (rounded up to 8) so the grid has >= 2 steps.
        half = _round_up(-(-R // 2), 8)
        br = max(8, min(target, half))
    return R, L, br


def _complex_relu_body(real, img, out_real_ref, out_img_ref):
    # out_real = relu(real); out_img = img where real >= 0 else 0.
    out_real_ref[...] = jnp.maximum(real, 0).astype(out_real_ref.dtype)
    out_img_ref[...] = jnp.where(real >= 0, img, jnp.zeros_like(img)).astype(
        out_img_ref.dtype
    )


def _pair_kernel(real_ref, img_ref, out_real_ref, out_img_ref):
    _complex_relu_body(real_ref[...], img_ref[...], out_real_ref, out_img_ref)


def _stacked_kernel(x_ref, out_real_ref, out_img_ref):
    # x_ref block is (2, br, L): plane 0 = real, plane 1 = img.
    _complex_relu_body(x_ref[0], x_ref[1], out_real_ref, out_img_ref)


def _compiler_params():
    return pltpu.CompilerParams(
        dimension_semantics=("parallel",),
        vmem_limit_bytes=48 << 20,
    )


def complex_relu(real, img=None):
    """Pallas implementation of complex_relu_layer.forward.

    Accepts either (real, img) or a single stacked input x where
    real = x[0], img = x[1] (mirrors the PyTorch `img is None` branch).
    """
    if img is None:
        stacked = real
        assert stacked.shape[0] == 2, "stacked input must have leading dim 2"
        plane_shape = stacked.shape[1:]
        dtype = stacked.dtype
        R, L, br = _choose_layout(plane_shape, dtype)
        x2d = stacked.reshape(2, R, L)  # free: row-major contiguous
        grid = (pl.cdiv(R, br),)
        in_spec = pl.BlockSpec((2, br, L), lambda i: (0, i, 0))
        out_spec = pl.BlockSpec((br, L), lambda i: (i, 0))
        out_real, out_img = pl.pallas_call(
            _stacked_kernel,
            out_shape=(
                jax.ShapeDtypeStruct((R, L), dtype),
                jax.ShapeDtypeStruct((R, L), dtype),
            ),
            grid_spec=pltpu.PrefetchScalarGridSpec(
                num_scalar_prefetch=0,
                grid=grid,
                in_specs=[in_spec],
                out_specs=[out_spec, out_spec],
            ),
            compiler_params=_compiler_params(),
        )(x2d)
        return out_real.reshape(plane_shape), out_img.reshape(plane_shape)

    assert real.shape == img.shape and real.dtype == img.dtype
    plane_shape = real.shape
    dtype = real.dtype
    R, L, br = _choose_layout(plane_shape, dtype)
    real2d = real.reshape(R, L)
    img2d = img.reshape(R, L)
    grid = (pl.cdiv(R, br),)
    spec = pl.BlockSpec((br, L), lambda i: (i, 0))
    out_real, out_img = pl.pallas_call(
        _pair_kernel,
        out_shape=(
            jax.ShapeDtypeStruct((R, L), dtype),
            jax.ShapeDtypeStruct((R, L), dtype),
        ),
        grid_spec=pltpu.PrefetchScalarGridSpec(
            num_scalar_prefetch=0,
            grid=grid,
            in_specs=[spec, spec],
            out_specs=[spec, spec],
        ),
        compiler_params=_compiler_params(),
    )(real2d, img2d)
    return out_real.reshape(plane_shape), out_img.reshape(plane_shape)


def _reference(real, img):
    mask = (real >= 0).astype(real.dtype)
    return mask * real, mask * img


if __name__ == "__main__":
    key = jax.random.PRNGKey(0)
    k1, k2, k3, k4 = jax.random.split(key, 4)

    # Small graph-ish shape: 64 nodes x 128 hidden features.
    N, F = 64, 128
    real = jax.random.normal(k1, (N, F), dtype=jnp.float32)
    img = jax.random.normal(k2, (N, F), dtype=jnp.float32)

    # Explicit (real, img) path.
    out_real, out_img = complex_relu(real, img)
    jax.block_until_ready((out_real, out_img))

    # Stacked single-argument path (img is None branch), no host slicing.
    stacked = jnp.stack([real, img], axis=0)
    out_real2, out_img2 = complex_relu(stacked)
    jax.block_until_ready((out_real2, out_img2))

    ref_real, ref_img = _reference(real, img)
    assert jnp.allclose(out_real, ref_real)
    assert jnp.allclose(out_img, ref_img)
    assert jnp.allclose(out_real2, ref_real)
    assert jnp.allclose(out_img2, ref_img)

    # A second, awkward shape (feature dim not a multiple of 128, ragged rows)
    # to exercise the lane-dense flatten + ragged-tail path.
    N2, F2 = 200, 96
    real_b = jax.random.normal(k3, (N2, F2), dtype=jnp.float32)
    img_b = jax.random.normal(k4, (N2, F2), dtype=jnp.float32)
    out_real_b, out_img_b = complex_relu(real_b, img_b)
    jax.block_until_ready((out_real_b, out_img_b))
    ref_real_b, ref_img_b = _reference(real_b, img_b)
    assert jnp.allclose(out_real_b, ref_real_b)
    assert jnp.allclose(out_img_b, ref_img_b)

    print("KERNEL_OK")
</pallas_src>

<mosaic_0001>
module attributes {stable_mosaic.version = 11 : i64} {
  func.func @_pair_kernel(%arg0: i32, %arg1: memref<2x4096xf32, #tpu.memory_space<vmem>>, %arg2: memref<2x4096xf32, #tpu.memory_space<vmem>>, %arg3: memref<2x4096xf32, #tpu.memory_space<vmem>>, %arg4: memref<2x4096xf32, #tpu.memory_space<vmem>>) attributes {dimension_semantics = [#tpu.dimension_semantics<parallel>], iteration_bounds = array<i64: 1>, scalar_prefetch = 0 : i64, scratch_operands = 0 : i64, tpu.core_type = #tpu.core_type<tc>, window_params = [{transform_indices = @transform_0, window_bounds = array<i64: 2, 4096>}, {transform_indices = @transform_1, window_bounds = array<i64: 2, 4096>}, {transform_indices = @transform_2, window_bounds = array<i64: 2, 4096>}, {transform_indices = @transform_3, window_bounds = array<i64: 2, 4096>}]} {
    %c0 = arith.constant 0 : index
    %c0_0 = arith.constant 0 : index
    %0 = vector.load %arg1[%c0, %c0_0] : memref<2x4096xf32, #tpu.memory_space<vmem>>, vector<2x4096xf32>
    %c0_1 = arith.constant 0 : index
    %c0_2 = arith.constant 0 : index
    %1 = vector.load %arg2[%c0_1, %c0_2] : memref<2x4096xf32, #tpu.memory_space<vmem>>, vector<2x4096xf32>
    %cst = arith.constant 0.000000e+00 : f32
    %2 = vector.broadcast %cst : f32 to vector<2x4096xf32>
    %3 = arith.maximumf %0, %2 : vector<2x4096xf32>
    %c0_3 = arith.constant 0 : index
    %c0_4 = arith.constant 0 : index
    %4 = vector.load %arg3[%c0_3, %c0_4] : memref<2x4096xf32, #tpu.memory_space<vmem>>, vector<2x4096xf32>
    tpu.vector_store %arg3[%c0_3, %c0_4], %3 {strides = array<i32>} : memref<2x4096xf32, #tpu.memory_space<vmem>>, vector<2x4096xf32>,
    %cst_5 = arith.constant 0.000000e+00 : f32
    %5 = vector.broadcast %cst_5 : f32 to vector<2x4096xf32>
    %6 = arith.cmpf oge, %0, %5 : vector<2x4096xf32>
    %cst_6 = arith.constant 0.000000e+00 : f32
    %7 = vector.broadcast %cst_6 : f32 to vector<2x4096xf32>
    %8 = arith.select %6, %1, %7 : vector<2x4096xi1>, vector<2x4096xf32>
    %c0_7 = arith.constant 0 : index
    %c0_8 = arith.constant 0 : index
    %9 = vector.load %arg4[%c0_7, %c0_8] : memref<2x4096xf32, #tpu.memory_space<vmem>>, vector<2x4096xf32>
    tpu.vector_store %arg4[%c0_7, %c0_8], %8 {strides = array<i32>} : memref<2x4096xf32, #tpu.memory_space<vmem>>, vector<2x4096xf32>,
    return
  }
  func.func @transform_0(%arg0: i32) -> (i32, i32) {
    %c0_i32 = arith.constant 0 : i32
    %c0_i32_0 = arith.constant 0 : i32
    return %arg0, %c0_i32 : i32, i32
  }
  func.func @transform_1(%arg0: i32) -> (i32, i32) {
    %c0_i32 = arith.constant 0 : i32
    %c0_i32_0 = arith.constant 0 : i32
    return %arg0, %c0_i32 : i32, i32
  }
  func.func @transform_2(%arg0: i32) -> (i32, i32) {
    %c0_i32 = arith.constant 0 : i32
    %c0_i32_0 = arith.constant 0 : i32
    return %arg0, %c0_i32 : i32, i32
  }
  func.func @transform_3(%arg0: i32) -> (i32, i32) {
    %c0_i32 = arith.constant 0 : i32
    %c0_i32_0 = arith.constant 0 : i32
    return %arg0, %c0_i32 : i32, i32
  }
}

</mosaic_0001>

<llo_original>
// kernel: tpu_custom_call.1
$region0: #{tpu_custom_call.1}
  #allocation0 [shape = 'u32[]', space=smem, size = 0x4, offset = 0x4, fixed_abs, tag = 'smem constant byte address 0x4 - core index']
  #allocation1 [shape = 'u32[72,128]{1,0:T(1,128)}', space=vmem, size = 0x9000, scoped, tag = 'internal scratch']
  %s0 = inlined_call_operand.hbm [shape: f32[2,4096], index: 0, kind: input, shape index: {}]
  %s1 = inlined_call_operand.hbm [shape: f32[2,4096], index: 1, kind: input, shape index: {}]
  %s2 = inlined_call_operand.hbm [shape: f32[2,4096], index: 2, kind: output, shape index: {0}]
  %s3 = inlined_call_operand.hbm [shape: f32[2,4096], index: 3, kind: output, shape index: {1}]
  %4 = xla_tuple %s2, %s3
  %s5 = sld [smem:[#allocation0]]
  $region34: #{tpu_custom_call.1} parent=0
    _
  %s7 = ssub.s32 1, %s5
  %s8 = scalar_select 0, %s7, %s5
  $region1: #{tpu_custom_call.1} parent=0
    #allocation2 [shape = 'u8[32768]{0}', space=vmem, size = 0x8000, scoped, tag = 'input window, operand 0, single buffered']
    #allocation3 [shape = 's32[1]{0}', space=sflag, size = 0x4, scoped, tag = 'scoped memory for tpu_custom_call.1']
    #allocation4 [shape = 's32[1]{0}', space=sflag, size = 0x4, scoped, tag = 'scoped memory for tpu_custom_call.1']
    #allocation5 [shape = 'u8[32768]{0}', space=vmem, size = 0x8000, scoped, tag = 'input window, operand 1, single buffered']
    #allocation6 [shape = 's32[1]{0}', space=sflag, size = 0x4, scoped, tag = 'scoped memory for tpu_custom_call.1']
    #allocation7 [shape = 'u8[32768]{0}', space=vmem, size = 0x8000, scoped, tag = 'output window, operand 0, single buffered']
    #allocation8 [shape = 'u8[32768]{0}', space=vmem, size = 0x8000, scoped, tag = 'output window, operand 1, single buffered']
    #allocation9 [shape = 's32[1]{0}', space=sflag, size = 0x4, scoped, tag = 'scoped memory for tpu_custom_call.1']
    %9 = vsyncpa [#allocation3], 0
    %10 = vsyncpa [#allocation6], 0
    %11 = vsyncpa [#allocation4], 0
    %12 = vsyncpa [#allocation9], 0
    // Predicated region
    $region2: #{tpu_custom_call.1} parent=1 // pred_check
      _
    $region3: #{tpu_custom_call.1} parent=1 // pred_check_branch
      %14 = sbr.rel (0) target = $region5
    $region4: #{tpu_custom_call.1} parent=1 // pred_region
      %16 = vsyncadd [#allocation3], 0
      %s18 = sshll.u32 %s0, 4
      %s19 = int_to_ptr.hbm [resolvable:$true] %s18
      %s20 = sshll.u32 [#allocation2], 4
      %s21 = int_to_ptr.vmem [resolvable:$true] %s20
      %23 = dma.hbm_to_vmem [thread:$0]  %s19, 1024, %s21, [#allocation3]
    $region5: #{tpu_custom_call.1} parent=1 // pred_fallthru
      _
    // Predicated region
    $region6: #{tpu_custom_call.1} parent=1 // pred_check
      _
    $region7: #{tpu_custom_call.1} parent=1 // pred_check_branch
      %25 = sbr.rel (0) target = $region9
    $region8: #{tpu_custom_call.1} parent=1 // pred_region
      %27 = vsyncadd [#allocation6], 0
      %s29 = sshll.u32 %s1, 4
      %s30 = int_to_ptr.hbm [resolvable:$true] %s29
      %s31 = sshll.u32 [#allocation5], 4
      %s32 = int_to_ptr.vmem [resolvable:$true] %s31
      %34 = dma.hbm_to_vmem [thread:$0]  %s30, 1024, %s32, [#allocation6]
    $region9: #{tpu_custom_call.1} parent=1 // pred_fallthru
      _
    // Predicated region
    $region10: #{tpu_custom_call.1} parent=1 // pred_check
      _
    $region11: #{tpu_custom_call.1} parent=1 // pred_check_branch
      %36 = sbr.rel (0) target = $region13
    $region12: #{tpu_custom_call.1} parent=1 // pred_region
      %38 = dma.done [#allocation3], 1024
    $region13: #{tpu_custom_call.1} parent=1 // pred_fallthru
      _
    // Predicated region
    $region14: #{tpu_custom_call.1} parent=1 // pred_check
      _
    $region15: #{tpu_custom_call.1} parent=1 // pred_check_branch
      %40 = sbr.rel (0) target = $region17
    $region16: #{tpu_custom_call.1} parent=1 // pred_region
      %42 = dma.done [#allocation6], 1024
    $region17: #{tpu_custom_call.1} parent=1 // pred_fallthru
      _
    %v43 = vld [vmem:[#allocation2] sm:$0xff]
    %v44 = vld [vmem:[#allocation2 + $0x8] sm:$0xff]
    %v45 = vld [vmem:[#allocation2 + $0x10] sm:$0xff]
    %v46 = vld [vmem:[#allocation2 + $0x18] sm:$0xff]
    %v47 = vld [vmem:[#allocation2 + $0x20] sm:$0xff]
    %v48 = vld [vmem:[#allocation2 + $0x28] sm:$0xff]
    %v49 = vld [vmem:[#allocation2 + $0x30] sm:$0xff]
    %v50 = vld [vmem:[#allocation2 + $0x38] sm:$0xff]
    %v51 = vld [vmem:[#allocation5] sm:$0xff]
    %v52 = vld [vmem:[#allocation5 + $0x8] sm:$0xff]
    %v53 = vld [vmem:[#allocation5 + $0x10] sm:$0xff]
    %v54 = vld [vmem:[#allocation5 + $0x18] sm:$0xff]
    %v55 = vld [vmem:[#allocation5 + $0x20] sm:$0xff]
    %v56 = vld [vmem:[#allocation5 + $0x28] sm:$0xff]
    %v57 = vld [vmem:[#allocation5 + $0x30] sm:$0xff]
    %v58 = vld [vmem:[#allocation5 + $0x38] sm:$0xff]
    %v59 = vmax.f32 %v43, 0.0
    %v60 = vmax.f32 %v44, 0.0
    %v61 = vmax.f32 %v45, 0.0
    %v62 = vmax.f32 %v46, 0.0
    %v63 = vmax.f32 %v47, 0.0
    %v64 = vmax.f32 %v48, 0.0
    %v65 = vmax.f32 %v49, 0.0
    %v66 = vmax.f32 %v50, 0.0
    %67 = vst [vmem:[#allocation7] sm:$0xff] %v59
    %68 = vst [vmem:[#allocation7 + $0x8] sm:$0xff] %v60
    %69 = vst [vmem:[#allocation7 + $0x10] sm:$0xff] %v61
    %70 = vst [vmem:[#allocation7 + $0x18] sm:$0xff] %v62
    %71 = vst [vmem:[#allocation7 + $0x20] sm:$0xff] %v63
    %72 = vst [vmem:[#allocation7 + $0x28] sm:$0xff] %v64
    %73 = vst [vmem:[#allocation7 + $0x30] sm:$0xff] %v65
    %74 = vst [vmem:[#allocation7 + $0x38] sm:$0xff] %v66
    %vm75 = vcmp.ge.f32.partialorder %v43, 0.0
    %vm76 = vcmp.ge.f32.partialorder %v44, 0.0
    %vm77 = vcmp.ge.f32.partialorder %v45, 0.0
    %vm78 = vcmp.ge.f32.partialorder %v46, 0.0
    %vm79 = vcmp.ge.f32.partialorder %v47, 0.0
    %vm80 = vcmp.ge.f32.partialorder %v48, 0.0
    %vm81 = vcmp.ge.f32.partialorder %v49, 0.0
    %vm82 = vcmp.ge.f32.partialorder %v50, 0.0
    %v83 = vsel %vm75, %v51, 0.0
    %v84 = vsel %vm76, %v52, 0.0
    %v85 = vsel %vm77, %v53, 0.0
    %v86 = vsel %vm78, %v54, 0.0
    %v87 = vsel %vm79, %v55, 0.0
    %v88 = vsel %vm80, %v56, 0.0
    %v89 = vsel %vm81, %v57, 0.0
    %v90 = vsel %vm82, %v58, 0.0
    %91 = vst [vmem:[#allocation8] sm:$0xff] %v83
    %92 = vst [vmem:[#allocation8 + $0x8] sm:$0xff] %v84
    %93 = vst [vmem:[#allocation8 + $0x10] sm:$0xff] %v85
    %94 = vst [vmem:[#allocation8 + $0x18] sm:$0xff] %v86
    %95 = vst [vmem:[#allocation8 + $0x20] sm:$0xff] %v87
    %96 = vst [vmem:[#allocation8 + $0x28] sm:$0xff] %v88
    %97 = vst [vmem:[#allocation8 + $0x30] sm:$0xff] %v89
    %98 = vst [vmem:[#allocation8 + $0x38] sm:$0xff] %v90
    // Predicated region
    $region18: #{tpu_custom_call.1} parent=1 // pred_check
      _
    $region19: #{tpu_custom_call.1} parent=1 // pred_check_branch
      %100 = sbr.rel (0) target = $region21
    $region20: #{tpu_custom_call.1} parent=1 // pred_region
      %102 = vsyncadd [#allocation4], 0
      %s104 = sshll.u32 [#allocation7], 4
      %s105 = int_to_ptr.vmem [resolvable:$true] %s104
      %s106 = sshll.u32 %s2, 4
      %s107 = int_to_ptr.hbm [resolvable:$true] %s106
      %109 = dma.vmem_to_hbm [thread:$0]  %s105, 1024, %s107, [#allocation4]
    $region21: #{tpu_custom_call.1} parent=1 // pred_fallthru
      _
    // Predicated region
    $region22: #{tpu_custom_call.1} parent=1 // pred_check
      _
    $region23: #{tpu_custom_call.1} parent=1 // pred_check_branch
      %111 = sbr.rel (0) target = $region25
    $region24: #{tpu_custom_call.1} parent=1 // pred_region
      %113 = vsyncadd [#allocation9], 0
      %s115 = sshll.u32 [#allocation8], 4
      %s116 = int_to_ptr.vmem [resolvable:$true] %s115
      %s117 = sshll.u32 %s3, 4
      %s118 = int_to_ptr.hbm [resolvable:$true] %s117
      %120 = dma.vmem_to_hbm [thread:$0]  %s116, 1024, %s118, [#allocation9]
    $region25: #{tpu_custom_call.1} parent=1 // pred_fallthru
      _
    // Predicated region
    $region26: #{tpu_custom_call.1} parent=1 // pred_check
      _
    $region27: #{tpu_custom_call.1} parent=1 // pred_check_branch
      %122 = sbr.rel (0) target = $region29
    $region28: #{tpu_custom_call.1} parent=1 // pred_region
      %124 = dma.done [#allocation4], 1024
    $region29: #{tpu_custom_call.1} parent=1 // pred_fallthru
      _
    // Predicated region
    $region30: #{tpu_custom_call.1} parent=1 // pred_check
      _
    $region31: #{tpu_custom_call.1} parent=1 // pred_check_branch
      %126 = sbr.rel (0) target = $region33
    $region32: #{tpu_custom_call.1} parent=1 // pred_region
      %128 = dma.done [#allocation9], 1024
    $region33: #{tpu_custom_call.1} parent=1 // pred_fallthru
      _
    %129 = vsyncpa [#allocation3], 1
    %130 = vsyncpa [#allocation6], 1
    %131 = vsyncpa [#allocation4], 1
    %132 = vsyncpa [#allocation9], 1

</llo_original>
